<compile_context>
chip_gen: v7x
topology: tpu7x:2x2x1
jax: 0.10.0
libtpu: 0.0.40
codegen_flags: <defaults>
</compile_context>

<pallas_src>
import functools

import jax
import jax.numpy as jnp
from jax.experimental import pallas as pl
from jax.experimental.pallas import tpu as pltpu

SUBLANE = 8
# (512, 1024) f32 block ~= 2 MiB per buffer; input + output double-buffered = 8 MiB,
# safe on v5e's 16 MiB scoped-VMEM default and amortizes per-step overhead on all gens.
MAX_BLOCK_ROWS = 512
_LANE_CHOICES = (1024, 512, 256, 128)


def _slab(total):
    """Choose lane-dense slab (rows, lanes), tail padding, and per-step block rows."""
    pad = 0
    rows = None
    # Prefer a lane width whose row count is a multiple of the sublane (8).
    for lanes in _LANE_CHOICES:
        if total % (lanes * SUBLANE) == 0:
            rows = total // lanes
            break
    if rows is None:
        # Any exact divisor (rows may be ragged w.r.t. 8; blocks stay (8,128)-aligned).
        for lanes in _LANE_CHOICES:
            if total % lanes == 0:
                rows = total // lanes
                break
    if rows is None:
        # Last resort: pad the flat tail up to a 128-lane boundary.
        lanes = 128
        rows = pl.cdiv(total, lanes)
        pad = rows * lanes - total

    if rows <= SUBLANE:
        block_rows = rows  # tiny input: single full-extent block
    else:
        # Keep >= 2 grid steps (v7x has 2 TensorCores), cap at MAX_BLOCK_ROWS,
        # keep the block sublane-aligned; ragged last block is masked by Pallas.
        half = -(-pl.cdiv(rows, 2) // SUBLANE) * SUBLANE
        block_rows = max(SUBLANE, min(MAX_BLOCK_ROWS, half))
    return rows, lanes, pad, block_rows


def _hard(x_f32, factor):
    # For factor > 0: sigmoid(x / factor) >= 0.5  <=>  x >= 0, so the forward value
    # of the straight-through estimator needs no transcendental at all.
    if factor > 0:
        return (x_f32 >= jnp.float32(0.0)).astype(jnp.float32)
    soft = jax.nn.sigmoid(x_f32 * jnp.float32(1.0 / factor))
    return (soft >= jnp.float32(0.5)).astype(jnp.float32)


def _train_kernel_tpu_prng(seed_ref, x_ref, o_ref, *, factor):
    """Training forward with in-kernel (hardware PRNG) Gumbel noise."""
    x = x_ref[...].astype(jnp.float32)

    # Fold (seed, program_id) so every grid step has an independent stream.
    pltpu.prng_seed(seed_ref[0], pl.program_id(0))
    bits = pltpu.prng_random_bits(x.shape)
    if bits.dtype != jnp.uint32:
        bits = pltpu.bitcast(bits, jnp.uint32)
    # Mantissa trick: uniform in [1, 2) -> [0, 1)
    mant = (bits >> jnp.uint32(9)) | jnp.uint32(0x3F800000)
    u = pltpu.bitcast(mant, jnp.float32) - jnp.float32(1.0)

    g = -jnp.log(-jnp.log(u + jnp.float32(1e-8)) + jnp.float32(1e-8))
    o_ref[...] = _hard(x + g, factor)


def _train_kernel_noise_in(x_ref, u_ref, o_ref, *, factor):
    """Training forward with uniform noise supplied as an input (non-TPU fallback)."""
    x = x_ref[...].astype(jnp.float32)
    u = u_ref[...].astype(jnp.float32)
    g = -jnp.log(-jnp.log(u + jnp.float32(1e-8)) + jnp.float32(1e-8))
    o_ref[...] = _hard(x + g, factor)


def _train_kernel_no_noise(x_ref, o_ref, *, factor):
    o_ref[...] = _hard(x_ref[...].astype(jnp.float32), factor)


def _eval_kernel(x_ref, o_ref):
    o_ref[...] = (x_ref[...] >= 0).astype(jnp.float32)


def gumbel_forward(x, *, factor=1.0, gumbel_noise=True, training=True, seed=0):
    """Forward pass of the Gumbel module. Returns a float32 array of x.shape."""
    if factor == 0:
        raise ValueError("Gumbel factor must be nonzero (x / factor is NaN at x == 0).")

    orig_shape = x.shape
    total = x.size
    rows, lanes, pad, block_rows = _slab(total)

    if pad:
        x2 = jnp.pad(x.reshape(-1), (0, pad)).reshape(rows, lanes)
    else:
        x2 = x.reshape(rows, lanes)  # contiguous reshape: no extra HBM traffic

    grid = (pl.cdiv(rows, block_rows),)
    blk = (block_rows, lanes)
    out_shape = jax.ShapeDtypeStruct((rows, lanes), jnp.float32)
    cparams = pltpu.CompilerParams(dimension_semantics=("parallel",))

    if not training:
        out2 = pl.pallas_call(
            _eval_kernel,
            out_shape=out_shape,
            grid=grid,
            in_specs=[pl.BlockSpec(blk, lambda i: (i, 0))],
            out_specs=pl.BlockSpec(blk, lambda i: (i, 0)),
            compiler_params=cparams,
        )(x2)
    elif not gumbel_noise:
        kern = functools.partial(_train_kernel_no_noise, factor=float(factor))
        out2 = pl.pallas_call(
            kern,
            out_shape=out_shape,
            grid=grid,
            in_specs=[pl.BlockSpec(blk, lambda i: (i, 0))],
            out_specs=pl.BlockSpec(blk, lambda i: (i, 0)),
            compiler_params=cparams,
        )(x2)
    elif jax.default_backend() == "tpu":
        # Preferred path: in-kernel hardware PRNG, seed scalar-prefetched to SMEM.
        # `seed` may be a Python int or a device scalar (kept async-dispatchable).
        seed_arr = jnp.asarray(seed, dtype=jnp.int32).reshape((1,))
        kern = functools.partial(_train_kernel_tpu_prng, factor=float(factor))
        out2 = pl.pallas_call(
            kern,
            out_shape=out_shape,
            grid_spec=pltpu.PrefetchScalarGridSpec(
                num_scalar_prefetch=1,
                grid=grid,
                in_specs=[pl.BlockSpec(blk, lambda i, seed_ref: (i, 0))],
                out_specs=pl.BlockSpec(blk, lambda i, seed_ref: (i, 0)),
            ),
            compiler_params=cparams,
        )(seed_arr, x2)
    else:
        # TODO(synk): pltpu.prng_seed/prng_random_bits have no CPU/interpret lowering;
        # off-TPU we feed host-generated uniforms into the kernel.
        u2 = jax.random.uniform(
            jax.random.PRNGKey(int(seed)), (rows, lanes), dtype=jnp.float32
        )
        kern = functools.partial(_train_kernel_noise_in, factor=float(factor))
        out2 = pl.pallas_call(
            kern,
            out_shape=out_shape,
            grid=grid,
            in_specs=[
                pl.BlockSpec(blk, lambda i: (i, 0)),
                pl.BlockSpec(blk, lambda i: (i, 0)),
            ],
            out_specs=pl.BlockSpec(blk, lambda i: (i, 0)),
            compiler_params=cparams,
        )(x2, u2)

    if pad:
        return out2.reshape(-1)[:total].reshape(orig_shape)
    return out2.reshape(orig_shape)


if __name__ == "__main__":
    # config.GUMBEL_FACTOR / config.GUMBEL_NOISE chosen deterministically in-script.
    GUMBEL_FACTOR = 1.0
    GUMBEL_NOISE = True

    key = jax.random.PRNGKey(0)
    k1, k2, k3 = jax.random.split(key, 3)

    # Primary small input consistent with the module (NCHW feature map).
    x = jax.random.normal(k1, (2, 4, 16, 16), dtype=jnp.float32)

    # Training-mode forward (Gumbel noise + straight-through binarization value).
    out_train = gumbel_forward(
        x, factor=GUMBEL_FACTOR, gumbel_noise=GUMBEL_NOISE, training=True, seed=1234
    )
    out_train = jax.block_until_ready(out_train)

    # Training-mode forward without noise (== (x >= 0).float() for factor > 0).
    out_nonoise = gumbel_forward(
        x, factor=GUMBEL_FACTOR, gumbel_noise=False, training=True
    )
    out_nonoise = jax.block_until_ready(out_nonoise)

    # Eval-mode forward: (x >= 0).float()
    out_eval = gumbel_forward(x, training=False)
    out_eval = jax.block_until_ready(out_eval)

    # Sanity checks on the primary input.
    assert out_train.shape == x.shape and out_train.dtype == jnp.float32
    assert bool(jnp.all((out_train == 0.0) | (out_train == 1.0)))
    assert not bool(jnp.any(jnp.isnan(out_train)))
    assert bool(jnp.all(out_eval == (x >= 0).astype(jnp.float32)))
    assert bool(jnp.all(out_nonoise == (x >= 0).astype(jnp.float32)))

    # Medium input: exercises the multi-step ("parallel") grid path.
    x_med = jax.random.normal(k2, (4, 4, 32, 32), dtype=jnp.float32)
    out_med = jax.block_until_ready(
        gumbel_forward(x_med, factor=GUMBEL_FACTOR, gumbel_noise=True, training=True, seed=7)
    )
    assert out_med.shape == x_med.shape
    assert bool(jnp.all((out_med == 0.0) | (out_med == 1.0)))
    assert not bool(jnp.any(jnp.isnan(out_med)))

    # Oddly-shaped input: exercises the tail-padding fallback path.
    x_odd = jax.random.normal(k3, (3, 5, 7), dtype=jnp.float32)
    out_odd = jax.block_until_ready(gumbel_forward(x_odd, training=False))
    assert out_odd.shape == x_odd.shape
    assert bool(jnp.all(out_odd == (x_odd >= 0).astype(jnp.float32)))

    print("KERNEL_OK")
</pallas_src>

<mosaic_0001>
module attributes {stable_mosaic.version = 11 : i64} {
  func.func @_train_kernel_noise_in(%arg0: i32, %arg1: memref<8x256xf32, #tpu.memory_space<vmem>>, %arg2: memref<8x256xf32, #tpu.memory_space<vmem>>, %arg3: memref<8x256xf32, #tpu.memory_space<vmem>>) attributes {dimension_semantics = [#tpu.dimension_semantics<parallel>], iteration_bounds = array<i64: 1>, scalar_prefetch = 0 : i64, scratch_operands = 0 : i64, tpu.core_type = #tpu.core_type<tc>, window_params = [{transform_indices = @transform_0, window_bounds = array<i64: 8, 256>}, {transform_indices = @transform_1, window_bounds = array<i64: 8, 256>}, {transform_indices = @transform_2, window_bounds = array<i64: 8, 256>}]} {
    %c0 = arith.constant 0 : index
    %c0_0 = arith.constant 0 : index
    %0 = vector.load %arg1[%c0, %c0_0] : memref<8x256xf32, #tpu.memory_space<vmem>>, vector<8x256xf32>
    %c0_1 = arith.constant 0 : index
    %c0_2 = arith.constant 0 : index
    %1 = vector.load %arg2[%c0_1, %c0_2] : memref<8x256xf32, #tpu.memory_space<vmem>>, vector<8x256xf32>
    %cst = arith.constant 9.99999993E-9 : f32
    %2 = vector.broadcast %cst : f32 to vector<8x256xf32>
    %3 = arith.addf %1, %2 : vector<8x256xf32>
    %4 = math.log %3 : vector<8x256xf32>
    %cst_3 = arith.constant 0.000000e+00 : f32
    %5 = vector.broadcast %cst_3 : f32 to vector<8x256xf32>
    %6 = arith.subf %5, %4 : vector<8x256xf32>
    %cst_4 = arith.constant 9.99999993E-9 : f32
    %7 = vector.broadcast %cst_4 : f32 to vector<8x256xf32>
    %8 = arith.addf %6, %7 : vector<8x256xf32>
    %9 = math.log %8 : vector<8x256xf32>
    %cst_5 = arith.constant 0.000000e+00 : f32
    %10 = vector.broadcast %cst_5 : f32 to vector<8x256xf32>
    %11 = arith.subf %10, %9 : vector<8x256xf32>
    %12 = arith.addf %0, %11 : vector<8x256xf32>
    %cst_6 = arith.constant 0.000000e+00 : f32
    %13 = vector.broadcast %cst_6 : f32 to vector<8x256xf32>
    %14 = arith.cmpf oge, %12, %13 : vector<8x256xf32>
    %15 = arith.extui %14 : vector<8x256xi1> to vector<8x256xi32>
    %16 = arith.sitofp %15 : vector<8x256xi32> to vector<8x256xf32>
    %c0_7 = arith.constant 0 : index
    %c0_8 = arith.constant 0 : index
    %17 = vector.load %arg3[%c0_7, %c0_8] : memref<8x256xf32, #tpu.memory_space<vmem>>, vector<8x256xf32>
    tpu.vector_store %arg3[%c0_7, %c0_8], %16 {strides = array<i32>} : memref<8x256xf32, #tpu.memory_space<vmem>>, vector<8x256xf32>,
    return
  }
  func.func @transform_0(%arg0: i32) -> (i32, i32) {
    %c0_i32 = arith.constant 0 : i32
    %c0_i32_0 = arith.constant 0 : i32
    return %arg0, %c0_i32 : i32, i32
  }
  func.func @transform_1(%arg0: i32) -> (i32, i32) {
    %c0_i32 = arith.constant 0 : i32
    %c0_i32_0 = arith.constant 0 : i32
    return %arg0, %c0_i32 : i32, i32
  }
  func.func @transform_2(%arg0: i32) -> (i32, i32) {
    %c0_i32 = arith.constant 0 : i32
    %c0_i32_0 = arith.constant 0 : i32
    return %arg0, %c0_i32 : i32, i32
  }
}

</mosaic_0001>

<llo_original>
// kernel: tpu_custom_call.1
$region0: #{tpu_custom_call.1}
  #allocation0 [shape = 'u32[]', space=smem, size = 0x4, offset = 0x4, fixed_abs, tag = 'smem constant byte address 0x4 - core index']
  #allocation1 [shape = 'u32[144,128]{1,0:T(1,128)}', space=vmem, size = 0x12000, scoped, tag = 'internal scratch']
  %s0 = inlined_call_operand.hbm [shape: f32[8,256], index: 0, kind: input, shape index: {}]
  %s1 = inlined_call_operand.hbm [shape: f32[8,256], index: 1, kind: input, shape index: {}]
  %s2 = inlined_call_operand.hbm [shape: f32[8,256], index: 2, kind: output, shape index: {}]
  %s3 = sld [smem:[#allocation0]]
  $region26: #{tpu_custom_call.1} parent=0
    _
  %s5 = ssub.s32 1, %s3
  %s6 = scalar_select 0, %s5, %s3
  $region1: #{tpu_custom_call.1} parent=0
    #allocation2 [shape = 'u8[8192]{0}', space=vmem, size = 0x2000, scoped, tag = 'input window, operand 0, single buffered']
    #allocation3 [shape = 's32[1]{0}', space=sflag, size = 0x4, scoped, tag = 'scoped memory for tpu_custom_call.1']
    #allocation4 [shape = 's32[1]{0}', space=sflag, size = 0x4, scoped, tag = 'scoped memory for tpu_custom_call.1']
    #allocation5 [shape = 'u8[8192]{0}', space=vmem, size = 0x2000, scoped, tag = 'input window, operand 1, single buffered']
    #allocation6 [shape = 's32[1]{0}', space=sflag, size = 0x4, scoped, tag = 'scoped memory for tpu_custom_call.1']
    #allocation7 [shape = 'u8[8192]{0}', space=vmem, size = 0x2000, scoped, tag = 'output window, operand 0, single buffered']
    %7 = vsyncpa [#allocation3], 0
    %8 = vsyncpa [#allocation6], 0
    %9 = vsyncpa [#allocation4], 0
    // Predicated region
    $region2: #{tpu_custom_call.1} parent=1 // pred_check
      _
    $region3: #{tpu_custom_call.1} parent=1 // pred_check_branch
      %11 = sbr.rel (0) target = $region5
    $region4: #{tpu_custom_call.1} parent=1 // pred_region
      %s13 = ssub.s32 256, 256
      %14 = vsyncadd [#allocation3], %s13
      %s16 = sshll.u32 [#allocation2], 4
      %s17 = int_to_ptr.vmem [resolvable:$true] %s16
      %19 = dma.hbm_to_vmem [thread:$0]  %s0, 256, %s17, [#allocation3]
    $region5: #{tpu_custom_call.1} parent=1 // pred_fallthru
      _
    // Predicated region
    $region6: #{tpu_custom_call.1} parent=1 // pred_check
      _
    $region7: #{tpu_custom_call.1} parent=1 // pred_check_branch
      %21 = sbr.rel (0) target = $region9
    $region8: #{tpu_custom_call.1} parent=1 // pred_region
      %s23 = ssub.s32 256, 256
      %24 = vsyncadd [#allocation6], %s23
      %s26 = sshll.u32 [#allocation5], 4
      %s27 = int_to_ptr.vmem [resolvable:$true] %s26
      %29 = dma.hbm_to_vmem [thread:$0]  %s1, 256, %s27, [#allocation6]
    $region9: #{tpu_custom_call.1} parent=1 // pred_fallthru
      _
    // Predicated region
    $region10: #{tpu_custom_call.1} parent=1 // pred_check
      _
    $region11: #{tpu_custom_call.1} parent=1 // pred_check_branch
      %31 = sbr.rel (0) target = $region13
    $region12: #{tpu_custom_call.1} parent=1 // pred_region
      %32 = dma.done [#allocation3], 256
    $region13: #{tpu_custom_call.1} parent=1 // pred_fallthru
      _
    // Predicated region
    $region14: #{tpu_custom_call.1} parent=1 // pred_check
      _
    $region15: #{tpu_custom_call.1} parent=1 // pred_check_branch
      %34 = sbr.rel (0) target = $region17
    $region16: #{tpu_custom_call.1} parent=1 // pred_region
      %35 = dma.done [#allocation6], 256
    $region17: #{tpu_custom_call.1} parent=1 // pred_fallthru
      _
    %v36 = vld [vmem:[#allocation2] sm:$0xff]
    %v37 = vld [vmem:[#allocation2 + $0x8] sm:$0xff]
    %v38 = vld [vmem:[#allocation5] sm:$0xff]
    %v39 = vld [vmem:[#allocation5 + $0x8] sm:$0xff]
    %v40 = vadd.f32 %v38, 1e-08
    %v41 = vadd.f32 %v39, 1e-08
    %v42 = vlog2.pop %v40
    %v43 = vmul.f32 %v42, 0.6931472
    %v44 = vlog2.pop %v41
    %v45 = vmul.f32 %v44, 0.6931472
    %v46 = vsub.f32 0.0, %v43
    %v47 = vsub.f32 0.0, %v45
    %v48 = vadd.f32 %v46, 1e-08
    %v49 = vadd.f32 %v47, 1e-08
    %v50 = vlog2.pop %v48
    %v51 = vmul.f32 %v50, 0.6931472
    %v52 = vlog2.pop %v49
    %v53 = vmul.f32 %v52, 0.6931472
    %v54 = vsub.f32 0.0, %v51
    %v55 = vsub.f32 0.0, %v53
    %v56 = vadd.f32 %v36, %v54
    %v57 = vadd.f32 %v37, %v55
    %vm58 = vcmp.ge.f32.partialorder %v56, 0.0
    %vm59 = vcmp.ge.f32.partialorder %v57, 0.0
    %v60 = vsel %vm58, 1, 0
    %v61 = vsel %vm59, 1, 0
    %v62 = vcvt.s32.f32 %v60
    %v63 = vcvt.s32.f32 %v61
    %64 = vst [vmem:[#allocation7] sm:$0xff] %v62
    %65 = vst [vmem:[#allocation7 + $0x8] sm:$0xff] %v63
    // Predicated region
    $region18: #{tpu_custom_call.1} parent=1 // pred_check
      _
    $region19: #{tpu_custom_call.1} parent=1 // pred_check_branch
      %67 = sbr.rel (0) target = $region21
    $region20: #{tpu_custom_call.1} parent=1 // pred_region
      %s69 = ssub.s32 256, 256
      %70 = vsyncadd [#allocation4], %s69
      %s72 = sshll.u32 [#allocation7], 4
      %s73 = int_to_ptr.vmem [resolvable:$true] %s72
      %75 = dma.vmem_to_hbm [thread:$0]  %s73, 256, %s2, [#allocation4]
    $region21: #{tpu_custom_call.1} parent=1 // pred_fallthru
      _
    // Predicated region
    $region22: #{tpu_custom_call.1} parent=1 // pred_check
      _
    $region23: #{tpu_custom_call.1} parent=1 // pred_check_branch
      %77 = sbr.rel (0) target = $region25
    $region24: #{tpu_custom_call.1} parent=1 // pred_region
      %78 = dma.done [#allocation4], 256
    $region25: #{tpu_custom_call.1} parent=1 // pred_fallthru
      _
    %79 = vsyncpa [#allocation3], 1
    %80 = vsyncpa [#allocation6], 1
    %81 = vsyncpa [#allocation4], 1

</llo_original>
